<compile_context>
chip_gen: v5e
topology: v5e:2x2
jax: 0.10.0
libtpu: 0.0.40
codegen_flags: <defaults>
</compile_context>

<pallas_src>
import functools

import jax
import jax.numpy as jnp
from jax.experimental import pallas as pl
from jax.experimental.pallas import tpu as pltpu

NUM_CLASSES = 5
HIDDEN = 256
BN_EPS = 1e-5


# ------------------------------ kernels ------------------------------------


def _softmax_lastdim(x):
    m = jnp.max(x, axis=-1, keepdims=True)
    e = jnp.exp(x - m)
    # exact reciprocal (approx=False) to hold tight agreement with the torch ref
    return e * pl.reciprocal(jnp.sum(e, axis=-1, keepdims=True), approx=False)


def _max_voting_kernel(x_ref, wpk_ref, bpk_ref, mw_ref, out_ref, *, num_models,
                       num_classes):
    # x: [bt, D], wpk: [D, M*NC], bpk: [1, M*NC], mw: [1, M] -> out: [bt, NC]
    x = x_ref[...]
    # One fused MXU pass for all models' logits (lane-major packed weights).
    logits_all = (
        jnp.dot(x, wpk_ref[...], preferred_element_type=jnp.float32) + bpk_ref[...]
    )
    w_soft = _softmax_lastdim(mw_ref[...])  # softmax over models, [1, M]
    acc = jnp.zeros(out_ref.shape, jnp.float32)
    for m in range(num_models):
        lg = logits_all[:, m * num_classes:(m + 1) * num_classes]
        probs = _softmax_lastdim(lg)
        acc = acc + probs * w_soft[:, m:m + 1]  # (1,1) broadcast over [bt, NC]
    out_ref[...] = jnp.log(acc + 1e-8)


def _mean_kernel(x_ref, wm_ref, bm_ref, out_ref):
    # Ensemble mean of linear models folded to one matmul:
    # mean_m (x @ W[m] + b[m]) == x @ mean_m W[m] + mean_m b[m]
    out_ref[...] = (
        jnp.dot(x_ref[...], wm_ref[...], preferred_element_type=jnp.float32)
        + bm_ref[...]
    )


def _stacking_kernel(x_ref, w1f_ref, b1f_ref, w2_ref, b2_ref, out_ref):
    # Stage 1 (base models + meta Linear1 + eval-BN folded in wrapper):
    #   h = relu(x @ W1f + b1f)          [bt, 256]   (lane-dense)
    # Dropout(0.3) is identity in eval mode.
    h = (
        jnp.dot(x_ref[...], w1f_ref[...], preferred_element_type=jnp.float32)
        + b1f_ref[...]
    )
    h = jnp.maximum(h, 0.0)
    out_ref[...] = (
        jnp.dot(h, w2_ref[...], preferred_element_type=jnp.float32) + b2_ref[...]
    )


# ------------------------------ wrapper ------------------------------------


def make_params(num_models, in_dim, num_classes=NUM_CLASSES, hidden=HIDDEN, seed=0):
    key = jax.random.PRNGKey(seed)
    ks = jax.random.split(key, 10)
    return {
        # base models: Linear(in_dim -> num_classes), stacked over models
        "w": jax.random.normal(ks[0], (num_models, in_dim, num_classes), jnp.float32) * 0.02,
        "b": jax.random.normal(ks[1], (num_models, 1, num_classes), jnp.float32) * 0.02,
        # nn.Parameter(torch.ones(M) / M)
        "model_weights": jnp.ones((1, num_models), jnp.float32) / num_models,
        # meta classifier: Linear(M*NC, 256) stored as [M, NC, 256]
        "w1": jax.random.normal(ks[2], (num_models, num_classes, hidden), jnp.float32) * 0.1,
        "b1": jax.random.normal(ks[3], (1, hidden), jnp.float32) * 0.1,
        # BatchNorm1d(256) raw running stats / affine params (eval mode)
        "bn_gamma": 1.0 + 0.1 * jax.random.normal(ks[4], (1, hidden), jnp.float32),
        "bn_beta": 0.1 * jax.random.normal(ks[5], (1, hidden), jnp.float32),
        "bn_mean": 0.1 * jax.random.normal(ks[6], (1, hidden), jnp.float32),
        "bn_var": 1.0 + 0.5 * jax.nn.softplus(jax.random.normal(ks[7], (1, hidden), jnp.float32)),
        "w2": jax.random.normal(ks[8], (hidden, num_classes), jnp.float32) * 0.1,
        "b2": jax.random.normal(ks[9], (1, num_classes), jnp.float32) * 0.1,
    }


def _batch_tile(batch):
    # 8-row sublane-aligned batch tile when possible; otherwise one full block.
    return 8 if batch % 8 == 0 else batch


def ensemble_forward(x_nchw, params, ensemble_methods):
    """Pallas implementation of EnsembleModel.forward (eval mode)."""
    B = x_nchw.shape[0]
    M, D, NC = params["w"].shape
    x_flat = x_nchw.reshape(B, -1).astype(jnp.float32)

    bt = _batch_tile(B)
    grid = (B // bt,)
    cparams = pltpu.CompilerParams(dimension_semantics=("parallel",))
    out_shape = jax.ShapeDtypeStruct((B, NC), jnp.float32)
    # NOTE: output last dim (5) is lane-sparse; negligible at this size, would be
    # padded to a lane-dense slab if the kernel were widened.
    out_spec = pl.BlockSpec((bt, NC), lambda i: (i, 0))
    x_spec = pl.BlockSpec((bt, D), lambda i: (i, 0))

    def full(shape):
        return pl.BlockSpec(shape, lambda i: tuple(0 for _ in shape))

    if ensemble_methods.get("max_voting", False):
        # Lane-major packed weights: [D, M*NC]; one MXU pass for all models.
        w_packed = jnp.transpose(params["w"], (1, 0, 2)).reshape(D, M * NC)
        b_packed = jnp.transpose(params["b"], (1, 0, 2)).reshape(1, M * NC)
        kernel = functools.partial(_max_voting_kernel, num_models=M, num_classes=NC)
        gs = pltpu.PrefetchScalarGridSpec(
            num_scalar_prefetch=0, grid=grid,
            in_specs=[x_spec, full((D, M * NC)), full((1, M * NC)), full((1, M))],
            out_specs=out_spec)
        return pl.pallas_call(kernel, out_shape=out_shape, grid_spec=gs,
                              compiler_params=cparams)(
            x_flat, w_packed, b_packed, params["model_weights"])

    elif ensemble_methods.get("stacking", False):
        # Fold base models + meta Linear1 + eval BatchNorm into one [D, HIDDEN] stage.
        w_fold = jnp.einsum("mdc,mch->dh", params["w"], params["w1"])      # [D, H]
        b_fold = jnp.einsum("moc,mch->oh", params["b"], params["w1"]) + params["b1"]
        bn_scale = params["bn_gamma"] / jnp.sqrt(params["bn_var"] + BN_EPS)
        bn_shift = params["bn_beta"] - params["bn_mean"] * bn_scale
        w1f = w_fold * bn_scale                                            # [D, H]
        b1f = b_fold * bn_scale + bn_shift                                 # [1, H]
        H = w1f.shape[1]
        gs = pltpu.PrefetchScalarGridSpec(
            num_scalar_prefetch=0, grid=grid,
            in_specs=[x_spec, full((D, H)), full((1, H)), full((H, NC)), full((1, NC))],
            out_specs=out_spec)
        return pl.pallas_call(_stacking_kernel, out_shape=out_shape, grid_spec=gs,
                              compiler_params=cparams)(
            x_flat, w1f, b1f, params["w2"], params["b2"])

    else:
        # Mean of linear models == one linear model with averaged params.
        w_mean = jnp.mean(params["w"], axis=0)   # [D, NC]
        b_mean = jnp.mean(params["b"], axis=0)   # [1, NC]
        gs = pltpu.PrefetchScalarGridSpec(
            num_scalar_prefetch=0, grid=grid,
            in_specs=[x_spec, full((D, NC)), full((1, NC))],
            out_specs=out_spec)
        return pl.pallas_call(_mean_kernel, out_shape=out_shape, grid_spec=gs,
                              compiler_params=cparams)(x_flat, w_mean, b_mean)


# ---------------------------- pure-JAX reference ----------------------------


def reference_forward(x_nchw, params, ensemble_methods):
    B = x_nchw.shape[0]
    xf = x_nchw.reshape(B, -1).astype(jnp.float32)
    logits = jnp.einsum("bd,mdc->mbc", xf, params["w"]) + params["b"]  # [M, B, NC]
    M = params["w"].shape[0]
    if ensemble_methods.get("max_voting", False):
        probs = jax.nn.softmax(logits, axis=-1)
        w_soft = jax.nn.softmax(params["model_weights"].reshape(M, 1, 1), axis=0)
        return jnp.log((probs * w_soft).sum(axis=0) + 1e-8)
    elif ensemble_methods.get("stacking", False):
        meta = jnp.transpose(logits, (1, 0, 2)).reshape(B, -1)             # [B, M*NC]
        h = meta @ params["w1"].reshape(M * NUM_CLASSES, HIDDEN) + params["b1"]
        # BatchNorm1d eval from raw running stats (validates the wrapper folding)
        h = (h - params["bn_mean"]) / jnp.sqrt(params["bn_var"] + BN_EPS)
        h = h * params["bn_gamma"] + params["bn_beta"]
        h = jnp.maximum(h, 0.0)
        return h @ params["w2"] + params["b2"]
    else:
        return jnp.mean(logits, axis=0)


# --------------------------------- main -------------------------------------


if __name__ == "__main__":
    B, C, H, W = 16, 4, 16, 16          # D = 1024; batch grid of 2 x 8-row tiles
    NUM_MODELS = 3

    key = jax.random.PRNGKey(0)
    x = jax.random.normal(key, (B, C, H, W), jnp.float32)
    params = make_params(NUM_MODELS, C * H * W)

    ok = True
    for methods in ({"max_voting": True}, {"stacking": True}, {}):
        out = jax.block_until_ready(ensemble_forward(x, params, methods))
        ref = reference_forward(x, params, methods)
        assert out.shape == (B, NUM_CLASSES), out.shape
        if not jnp.allclose(out, ref, rtol=1e-3, atol=1e-3):
            ok = False
            print(f"MISMATCH for {methods}: max abs err "
                  f"{float(jnp.max(jnp.abs(out - ref)))}")

    if ok:
        print("KERNEL_OK")
</pallas_src>

<mosaic_0001>
module attributes {stable_mosaic.version = 11 : i64} {
  func.func @_max_voting_kernel(%arg0: i32, %arg1: memref<8x1024xf32, #tpu.memory_space<vmem>>, %arg2: memref<1024x15xf32, #tpu.memory_space<vmem>>, %arg3: memref<1x15xf32, #tpu.memory_space<vmem>>, %arg4: memref<1x3xf32, #tpu.memory_space<vmem>>, %arg5: memref<8x5xf32, #tpu.memory_space<vmem>>) attributes {dimension_semantics = [#tpu.dimension_semantics<parallel>], iteration_bounds = array<i64: 2>, scalar_prefetch = 0 : i64, scratch_operands = 0 : i64, tpu.core_type = #tpu.core_type<tc>, window_params = [{transform_indices = @transform_0, window_bounds = array<i64: 8, 1024>}, {pipeline_mode = #tpu.pipeline_mode<synchronous>, transform_indices = @transform_1, window_bounds = array<i64: 1024, 15>}, {pipeline_mode = #tpu.pipeline_mode<synchronous>, transform_indices = @transform_2, window_bounds = array<i64: 1, 15>}, {pipeline_mode = #tpu.pipeline_mode<synchronous>, transform_indices = @transform_3, window_bounds = array<i64: 1, 3>}, {transform_indices = @transform_4, window_bounds = array<i64: 8, 5>}]} {
    %c0 = arith.constant 0 : index
    %c0_0 = arith.constant 0 : index
    %0 = vector.load %arg1[%c0, %c0_0] : memref<8x1024xf32, #tpu.memory_space<vmem>>, vector<8x1024xf32>
    %c0_1 = arith.constant 0 : index
    %c0_2 = arith.constant 0 : index
    %1 = vector.load %arg2[%c0_1, %c0_2] : memref<1024x15xf32, #tpu.memory_space<vmem>>, vector<1024x15xf32>
    %cst = arith.constant dense<0.000000e+00> : vector<8x15xf32>
    %2 = tpu.matmul %0, %1, %cst {dimension_numbers = #tpu.dot_dimension_numbers<[1], [0], [0], [1], [0, 0, 1, 1], [], []>} : vector<8x1024xf32>, vector<1024x15xf32>, vector<8x15xf32> -> vector<8x15xf32>
    %c0_3 = arith.constant 0 : index
    %c0_4 = arith.constant 0 : index
    %3 = vector.load %arg3[%c0_3, %c0_4] : memref<1x15xf32, #tpu.memory_space<vmem>>, vector<1x15xf32>
    %4 = vector.broadcast %3 : vector<1x15xf32> to vector<8x15xf32>
    %5 = arith.addf %2, %4 : vector<8x15xf32>
    %c0_5 = arith.constant 0 : index
    %c0_6 = arith.constant 0 : index
    %6 = vector.load %arg4[%c0_5, %c0_6] : memref<1x3xf32, #tpu.memory_space<vmem>>, vector<1x3xf32>
    %cst_7 = arith.constant dense<0xFF800000> : vector<1xf32>
    %7 = vector.multi_reduction <maximumf>, %6, %cst_7 [1] : vector<1x3xf32> to vector<1xf32>
    %8 = vector.shape_cast %7 : vector<1xf32> to vector<1x1xf32>
    %9 = vector.broadcast %8 : vector<1x1xf32> to vector<1x3xf32>
    %10 = arith.subf %6, %9 : vector<1x3xf32>
    %11 = math.exp %10 : vector<1x3xf32>
    %cst_8 = arith.constant dense<0.000000e+00> : vector<1xf32>
    %12 = vector.multi_reduction <add>, %11, %cst_8 [1] : vector<1x3xf32> to vector<1xf32>
    %13 = vector.shape_cast %12 : vector<1xf32> to vector<1x1xf32>
    %14 = tpu.reciprocal %13 : vector<1x1xf32> -> vector<1x1xf32>
    %15 = vector.broadcast %14 : vector<1x1xf32> to vector<1x3xf32>
    %16 = arith.mulf %11, %15 : vector<1x3xf32>
    %cst_9 = arith.constant 0.000000e+00 : f32
    %17 = vector.broadcast %cst_9 : f32 to vector<8x5xf32>
    %18 = vector.extract_strided_slice %5 {offsets = [0, 0], sizes = [8, 5], strides = [1, 1]} : vector<8x15xf32> to vector<8x5xf32>
    %cst_10 = arith.constant dense<0xFF800000> : vector<8xf32>
    %19 = vector.multi_reduction <maximumf>, %18, %cst_10 [1] : vector<8x5xf32> to vector<8xf32>
    %20 = vector.shape_cast %19 : vector<8xf32> to vector<8x1xf32>
    %21 = vector.broadcast %20 : vector<8x1xf32> to vector<8x5xf32>
    %22 = arith.subf %18, %21 : vector<8x5xf32>
    %23 = math.exp %22 : vector<8x5xf32>
    %cst_11 = arith.constant dense<0.000000e+00> : vector<8xf32>
    %24 = vector.multi_reduction <add>, %23, %cst_11 [1] : vector<8x5xf32> to vector<8xf32>
    %25 = vector.shape_cast %24 : vector<8xf32> to vector<8x1xf32>
    %26 = tpu.reciprocal %25 : vector<8x1xf32> -> vector<8x1xf32>
    %27 = vector.broadcast %26 : vector<8x1xf32> to vector<8x5xf32>
    %28 = arith.mulf %23, %27 : vector<8x5xf32>
    %29 = vector.extract_strided_slice %16 {offsets = [0, 0], sizes = [1, 1], strides = [1, 1]} : vector<1x3xf32> to vector<1x1xf32>
    %30 = vector.broadcast %29 : vector<1x1xf32> to vector<8x5xf32>
    %31 = arith.mulf %28, %30 : vector<8x5xf32>
    %32 = arith.addf %17, %31 : vector<8x5xf32>
    %33 = vector.extract_strided_slice %5 {offsets = [0, 5], sizes = [8, 5], strides = [1, 1]} : vector<8x15xf32> to vector<8x5xf32>
    %cst_12 = arith.constant dense<0xFF800000> : vector<8xf32>
    %34 = vector.multi_reduction <maximumf>, %33, %cst_12 [1] : vector<8x5xf32> to vector<8xf32>
    %35 = vector.shape_cast %34 : vector<8xf32> to vector<8x1xf32>
    %36 = vector.broadcast %35 : vector<8x1xf32> to vector<8x5xf32>
    %37 = arith.subf %33, %36 : vector<8x5xf32>
    %38 = math.exp %37 : vector<8x5xf32>
    %cst_13 = arith.constant dense<0.000000e+00> : vector<8xf32>
    %39 = vector.multi_reduction <add>, %38, %cst_13 [1] : vector<8x5xf32> to vector<8xf32>
    %40 = vector.shape_cast %39 : vector<8xf32> to vector<8x1xf32>
    %41 = tpu.reciprocal %40 : vector<8x1xf32> -> vector<8x1xf32>
    %42 = vector.broadcast %41 : vector<8x1xf32> to vector<8x5xf32>
    %43 = arith.mulf %38, %42 : vector<8x5xf32>
    %44 = vector.extract_strided_slice %16 {offsets = [0, 1], sizes = [1, 1], strides = [1, 1]} : vector<1x3xf32> to vector<1x1xf32>
    %45 = vector.broadcast %44 : vector<1x1xf32> to vector<8x5xf32>
    %46 = arith.mulf %43, %45 : vector<8x5xf32>
    %47 = arith.addf %32, %46 : vector<8x5xf32>
    %48 = vector.extract_strided_slice %5 {offsets = [0, 10], sizes = [8, 5], strides = [1, 1]} : vector<8x15xf32> to vector<8x5xf32>
    %cst_14 = arith.constant dense<0xFF800000> : vector<8xf32>
    %49 = vector.multi_reduction <maximumf>, %48, %cst_14 [1] : vector<8x5xf32> to vector<8xf32>
    %50 = vector.shape_cast %49 : vector<8xf32> to vector<8x1xf32>
    %51 = vector.broadcast %50 : vector<8x1xf32> to vector<8x5xf32>
    %52 = arith.subf %48, %51 : vector<8x5xf32>
    %53 = math.exp %52 : vector<8x5xf32>
    %cst_15 = arith.constant dense<0.000000e+00> : vector<8xf32>
    %54 = vector.multi_reduction <add>, %53, %cst_15 [1] : vector<8x5xf32> to vector<8xf32>
    %55 = vector.shape_cast %54 : vector<8xf32> to vector<8x1xf32>
    %56 = tpu.reciprocal %55 : vector<8x1xf32> -> vector<8x1xf32>
    %57 = vector.broadcast %56 : vector<8x1xf32> to vector<8x5xf32>
    %58 = arith.mulf %53, %57 : vector<8x5xf32>
    %59 = vector.extract_strided_slice %16 {offsets = [0, 2], sizes = [1, 1], strides = [1, 1]} : vector<1x3xf32> to vector<1x1xf32>
    %60 = vector.broadcast %59 : vector<1x1xf32> to vector<8x5xf32>
    %61 = arith.mulf %58, %60 : vector<8x5xf32>
    %62 = arith.addf %47, %61 : vector<8x5xf32>
    %cst_16 = arith.constant 9.99999993E-9 : f32
    %63 = vector.broadcast %cst_16 : f32 to vector<8x5xf32>
    %64 = arith.addf %62, %63 : vector<8x5xf32>
    %65 = math.log %64 : vector<8x5xf32>
    %c0_17 = arith.constant 0 : index
    %c0_18 = arith.constant 0 : index
    %66 = vector.load %arg5[%c0_17, %c0_18] : memref<8x5xf32, #tpu.memory_space<vmem>>, vector<8x5xf32>
    tpu.vector_store %arg5[%c0_17, %c0_18], %65 {strides = array<i32>} : memref<8x5xf32, #tpu.memory_space<vmem>>, vector<8x5xf32>,
    return
  }
  func.func @transform_0(%arg0: i32) -> (i32, i32) {
    %c0_i32 = arith.constant 0 : i32
    %c0_i32_0 = arith.constant 0 : i32
    return %arg0, %c0_i32 : i32, i32
  }
  func.func @transform_1(%arg0: i32) -> (i32, i32) {
    %c0_i32 = arith.constant 0 : i32
    %c0_i32_0 = arith.constant 0 : i32
    %c0_i32_1 = arith.constant 0 : i32
    return %c0_i32, %c0_i32_0 : i32, i32
  }
  func.func @transform_2(%arg0: i32) -> (i32, i32) {
    %c0_i32 = arith.constant 0 : i32
    %c0_i32_0 = arith.constant 0 : i32
    %c0_i32_1 = arith.constant 0 : i32
    return %c0_i32, %c0_i32_0 : i32, i32
  }
  func.func @transform_3(%arg0: i32) -> (i32, i32) {
    %c0_i32 = arith.constant 0 : i32
    %c0_i32_0 = arith.constant 0 : i32
    %c0_i32_1 = arith.constant 0 : i32
    return %c0_i32, %c0_i32_0 : i32, i32
  }
  func.func @transform_4(%arg0: i32) -> (i32, i32) {
    %c0_i32 = arith.constant 0 : i32
    %c0_i32_0 = arith.constant 0 : i32
    return %arg0, %c0_i32 : i32, i32
  }
}

</mosaic_0001>

<llo_original>
// kernel: tpu_custom_call.1
$region0: #{tpu_custom_call.1}
  #allocation0 [shape = 'u32[]', space=smem, size = 0x4, offset = 0x4, fixed_abs, tag = 'smem constant byte address 0x4 - core index']
  #allocation1 [shape = 'u32[72,128]{1,0:T(1,128)}', space=vmem, size = 0x9000, scoped, tag = 'internal scratch']
  %s0 = inlined_call_operand.vmem [shape: f32[16,1024], index: 0, kind: input, shape index: {}]
  %s1 = inlined_call_operand.vmem [shape: f32[1024,15], index: 1, kind: input, shape index: {}]
  %s2 = inlined_call_operand.vmem [shape: f32[1,15], index: 2, kind: input, shape index: {}]
  %s3 = inlined_call_operand.vmem [shape: f32[1,3], index: 3, kind: input, shape index: {}]
  %s4 = inlined_call_operand.vmem [shape: f32[16,5], index: 4, kind: output, shape index: {}]
  %s5 = sld [smem:[#allocation0]]
  $region49: #{tpu_custom_call.1} parent=0
    _
  %s7 = ssub.s32 1, %s5
  %s8 = scalar_select 0, %s7, %s5
  loop: start=0, step=1, limit=4
  $region2: #{tpu_custom_call.1} parent=0 // loop_pre_header
    _
  $region3: #{tpu_custom_call.1} parent=0 // loop_header
    %s10 = sphi 0, %s14
    %p11 = scmp.ge.s32.totalorder %s10, 4
    %s20 = sphi 0, %s22
    %s23 = sphi 0, %s20
    %s24 = sphi 0, %s23
    %s40 = sphi 0, %s24
    %s44 = sphi 0, %s44
    %s46 = sphi 0, %s44
    %s47 = sphi 0, %s46
    %s61 = sphi 0, %s47
    %s65 = sphi 0, %s65
    %s67 = sphi 0, %s65
    %s68 = sphi 0, %s67
    %s82 = sphi 0, %s68
    %s86 = sphi 0, %s86
    %s88 = sphi 0, %s86
    %s89 = sphi 0, %s88
    %s103 = sphi 0, %s89
    %s109 = sphi 0, %s111
    %s112 = sphi 0, %s109
    %s113 = sphi 0, %s112
    %s129 = sphi 0, %s113
  $region4: #{tpu_custom_call.1} parent=0 // loop_header_branch
    %13 = sbr.rel (%p11) target = $region8
  $region5: #{tpu_custom_call.1} parent=0 // loop_body
    %s15 = ssub.s32 %s10, 1
    %s16 = ssub.s32 %s10, 2
    %s17 = sadd.s32 %s10, 1
    %s18 = ssub.s32 %s10, %s17
    %p19 = scmp.eq.s32.totalorder %s18, 0
    %s21 = sadd.s32 %s20, 1
    %s22 = scalar_select %p19, %s20, %s21
    %p25 = pneg %p19
    %p26 = scmp.eq.s32.totalorder %s10, 1
    %p27 = por %p25, %p26
    %p28 = scmp.ne.s32.totalorder %s20, %s23
    %p29 = scmp.eq.s32.totalorder %s10, 0
    %p30 = por %p28, %p29
    %p31 = scmp.ne.s32.totalorder %s20, %s23
    %p32 = scmp.eq.s32.totalorder %s15, 1
    %p33 = por %p31, %p32
    %p34 = scmp.ne.s32.totalorder %s23, %s24
    %p35 = scmp.eq.s32.totalorder %s15, 0
    %p36 = por %p34, %p35
    %p37 = scmp.ne.s32.totalorder %s23, %s24
    %p38 = scmp.eq.s32.totalorder %s16, 1
    %p39 = por %p37, %p38
    %p41 = scmp.ne.s32.totalorder %s24, %s40
    %p42 = scmp.eq.s32.totalorder %s16, 0
    %p43 = por %p41, %p42
    %s45 = sadd.s32 %s44, 1
    %p48 = scmp.eq.s32.totalorder %s10, 1
    %p49 = scmp.ne.s32.totalorder %s44, %s46
    %p50 = scmp.eq.s32.totalorder %s10, 0
    %p51 = por %p49, %p50
    %p52 = scmp.ne.s32.totalorder %s44, %s46
    %p53 = scmp.eq.s32.totalorder %s15, 1
    %p54 = por %p52, %p53
    %p55 = scmp.ne.s32.totalorder %s46, %s47
    %p56 = scmp.eq.s32.totalorder %s15, 0
    %p57 = por %p55, %p56
    %p58 = scmp.ne.s32.totalorder %s46, %s47
    %p59 = scmp.eq.s32.totalorder %s16, 1
    %p60 = por %p58, %p59
    %p62 = scmp.ne.s32.totalorder %s47, %s61
    %p63 = scmp.eq.s32.totalorder %s16, 0
    %p64 = por %p62, %p63
    %s66 = sadd.s32 %s65, 1
    %p69 = scmp.eq.s32.totalorder %s10, 1
    %p70 = scmp.ne.s32.totalorder %s65, %s67
    %p71 = scmp.eq.s32.totalorder %s10, 0
    %p72 = por %p70, %p71
    %p73 = scmp.ne.s32.totalorder %s65, %s67
    %p74 = scmp.eq.s32.totalorder %s15, 1
    %p75 = por %p73, %p74
    %p76 = scmp.ne.s32.totalorder %s67, %s68
    %p77 = scmp.eq.s32.totalorder %s15, 0
    %p78 = por %p76, %p77
    %p79 = scmp.ne.s32.totalorder %s67, %s68
    %p80 = scmp.eq.s32.totalorder %s16, 1
    %p81 = por %p79, %p80
    %p83 = scmp.ne.s32.totalorder %s68, %s82
    %p84 = scmp.eq.s32.totalorder %s16, 0
    %p85 = por %p83, %p84
    %s87 = sadd.s32 %s86, 1
    %p90 = scmp.eq.s32.totalorder %s10, 1
    %p91 = scmp.ne.s32.totalorder %s86, %s88
    %p92 = scmp.eq.s32.totalorder %s10, 0
    %p93 = por %p91, %p92
    %p94 = scmp.ne.s32.totalorder %s86, %s88
    %p95 = scmp.eq.s32.totalorder %s15, 1
    %p96 = por %p94, %p95
    %p97 = scmp.ne.s32.totalorder %s88, %s89
    %p98 = scmp.eq.s32.totalorder %s15, 0
    %p99 = por %p97, %p98
    %p100 = scmp.ne.s32.totalorder %s88, %s89
    %p101 = scmp.eq.s32.totalorder %s16, 1
    %p102 = por %p100, %p101
    %p104 = scmp.ne.s32.totalorder %s89, %s103
    %p105 = scmp.eq.s32.totalorder %s16, 0
    %p106 = por %p104, %p105
    %s107 = ssub.s32 %s10, %s17
    %p108 = scmp.eq.s32.totalorder %s107, 0
    %s110 = sadd.s32 %s109, 1
    %s111 = scalar_select %p108, %s109, %s110
    %p114 = pneg %p108
    %p115 = scmp.eq.s32.totalorder %s10, 1
    %p116 = por %p114, %p115
    %p117 = scmp.ne.s32.totalorder %s109, %s112
    %p118 = scmp.eq.s32.totalorder %s10, 0
    %p119 = por %p117, %p118
    %p120 = scmp.ne.s32.totalorder %s109, %s112
    %p121 = scmp.eq.s32.totalorder %s15, 1
    %p122 = por %p120, %p121
    %p123 = scmp.ne.s32.totalorder %s112, %s113
    %p124 = scmp.eq.s32.totalorder %s15, 0
    %p125 = por %p123, %p124
    %p126 = scmp.ne.s32.totalorder %s112, %s113
    %p127 = scmp.eq.s32.totalorder %s16, 1
    %p128 = por %p126, %p127
    %p130 = scmp.ne.s32.totalorder %s113, %s129
    %p131 = scmp.eq.s32.totalorder %s16, 0
    %p132 = por %p130, %p131
    %p133 = scmp.le.s32.totalorder 1, %s10
    %p134 = scmp.lt.s32.totalorder %s10, 3
    %p135 = pnand %p133, %p134
    %p136 = pneg %p135
    // Predicated region
    $region9: #{tpu_custom_call.1} parent=5 // pred_check
      _
    $region10: #{tpu_custom_call.1} parent=5 // pred_check_branch
      %138 = sbr.rel (%p135) target = $region12
    $region11: #{tpu_custom_call.1} parent=5 // pred_region
      %s139 = ssub.s32 %s10, 1
      // Predicated region
      $region13: #{tpu_custom_call.1} parent=11 // pred_check
        %p140 = pneg %p57
      $region14: #{tpu_custom_call.1} parent=11 // pred_check_branch
        %142 = sbr.rel (%p140) target = $region16
      $region15: #{tpu_custom_call.1} parent=11 // pred_region
        _
      $region16: #{tpu_custom_call.1} parent=11 // pred_fallthru
        _
      // Predicated region
      $region17: #{tpu_custom_call.1} parent=11 // pred_check
        %p143 = pneg %p78
      $region18: #{tpu_custom_call.1} parent=11 // pred_check_branch
        %145 = sbr.rel (%p143) target = $region20
      $region19: #{tpu_custom_call.1} parent=11 // pred_region
        _
      $region20: #{tpu_custom_call.1} parent=11 // pred_fallthru
        _
      // Predicated region
      $region21: #{tpu_custom_call.1} parent=11 // pred_check
        %p146 = pneg %p99
      $region22: #{tpu_custom_call.1} parent=11 // pred_check_branch
        %148 = sbr.rel (%p146) target = $region24
      $region23: #{tpu_custom_call.1} parent=11 // pred_region
        _
      $region24: #{tpu_custom_call.1} parent=11 // pred_fallthru
        _
    $region12: #{tpu_custom_call.1} parent=5 // pred_fallthru
      _
    %p149 = scmp.lt.s32.totalorder %s10, 2
    // Predicated region
    $region25: #{tpu_custom_call.1} parent=5 // pred_check
      %p150 = pneg %p149
    $region26: #{tpu_custom_call.1} parent=5 // pred_check_branch
      %152 = sbr.rel (%p150) target = $region28
    $region27: #{tpu_custom_call.1} parent=5 // pred_region
      // Predicated region
      $region29: #{tpu_custom_call.1} parent=27 // pred_check
        %p153 = pneg %p30
      $region30: #{tpu_custom_call.1} parent=27 // pred_check_branch
        %155 = sbr.rel (%p153) target = $region32
      $region31: #{tpu_custom_call.1} parent=27 // pred_region
        %p156 = scmp.lt.s32.totalorder %s10, 1
        %s157 = scalar_select %p156, %s10, 1
        %s158 = smul.addr %s157, 8
        %s159 = smul.addr %s158, 8
        %s160 = scalar_lea.vmem %s0, %s159
      $region32: #{tpu_custom_call.1} parent=27 // pred_fallthru
        _
    $region28: #{tpu_custom_call.1} parent=5 // pred_fallthru
      _
    %p161 = scmp.le.s32.totalorder 1, %s10
    %p162 = scmp.lt.s32.totalorder %s10, 3
    %p163 = pnand %p161, %p162
    %p164 = pneg %p163
    // Predicated region
    $region33: #{tpu_custom_call.1} parent=5 // pred_check
      _
    $region34: #{tpu_custom_call.1} parent=5 // pred_check_branch
      %166 = sbr.rel (%p163) target = $region36
    $region35: #{tpu_custom_call.1} parent=5 // pred_region
      %s167 = ssub.s32 %s10, 1
      %p168 = scmp.lt.s32.totalorder %s15, 1
      %s169 = scalar_select %p168, %s15, 1
      %s170 = smul.addr %s169, 8
      %s171 = smul.addr %s170, 8
      %s172 = scalar_lea.vmem %s0, %s171
      %p173 = pneg %p36
      %p174 = pneg %p33
      %p175 = pneg %p57
      %p176 = pneg %p54
      %p177 = pneg %p78
      %p178 = pneg %p75
      %p179 = pneg %p99
      %p180 = pneg %p96
      %p181 = pneg %p125
      %p182 = pneg %p122
      %p183 = scmp.lt.s32.totalorder %s15, 1
      %s184 = scalar_select %p183, %s15, 1
      %s185 = smul.addr %s184, 8
      %s186 = scalar_lea.vmem %s4, %s185
      %p187 = scmp.lt.s32.totalorder %s15, 1
      %s188 = scalar_select %p187, %s15, 1
      %s189 = smul.addr %s188, 8
      %s190 = smul.addr %s189, 8
      %s191 = scalar_lea.vmem %s0, %s190
      %p192 = scmp.lt.s32.totalorder %s15, 1
      %s193 = scalar_select %p192, %s15, 1
      %s194 = smul.addr %s193, 8
      %s195 = scalar_lea.vmem %s4, %s194
      %v196 = vld [vmem:[%s191] sm:$0xff]
      %v197 = vld [vmem:[%s191 + $0x8] sm:$0xff]
      %v198 = vld [vmem:[%s191 + $0x10] sm:$0xff]
      %v199 = vld [vmem:[%s191 + $0x18] sm:$0xff]
      %v200 = vld [vmem:[%s191 + $0x20] sm:$0xff]
      %v201 = vld [vmem:[%s191 + $0x28] sm:$0xff]
      %v202 = vld [vmem:[%s191 + $0x30] sm:$0xff]
      %v203 = vld [vmem:[%s191 + $0x38] sm:$0xff]
      %v204 = vld [vmem:[%s1] sm:$0xff]
      %v205 = vld [vmem:[%s1 + $0x8] sm:$0xff]
      %v206 = vld [vmem:[%s1 + $0x10] sm:$0xff]
      %v207 = vld [vmem:[%s1 + $0x18] sm:$0xff]
      %v208 = vld [vmem:[%s1 + $0x20] sm:$0xff]
      %v209 = vld [vmem:[%s1 + $0x28] sm:$0xff]
      %v210 = vld [vmem:[%s1 + $0x30] sm:$0xff]
      %v211 = vld [vmem:[%s1 + $0x38] sm:$0xff]
      %v212 = vld [vmem:[%s1 + $0x40] sm:$0xff]
      %v213 = vld [vmem:[%s1 + $0x48] sm:$0xff]
      %v214 = vld [vmem:[%s1 + $0x50] sm:$0xff]
      %v215 = vld [vmem:[%s1 + $0x58] sm:$0xff]
      %v216 = vld [vmem:[%s1 + $0x60] sm:$0xff]
      %v217 = vld [vmem:[%s1 + $0x68] sm:$0xff]
      %v218 = vld [vmem:[%s1 + $0x70] sm:$0xff]
      %v219 = vld [vmem:[%s1 + $0x78] sm:$0xff]
      %v220 = vld [vmem:[%s1 + $0x80] sm:$0xff]
      %v221 = vld [vmem:[%s1 + $0x88] sm:$0xff]
      %v222 = vld [vmem:[%s1 + $0x90] sm:$0xff]
      %v223 = vld [vmem:[%s1 + $0x98] sm:$0xff]
      %v224 = vld [vmem:[%s1 + $0xa0] sm:$0xff]
      %v225 = vld [vmem:[%s1 + $0xa8] sm:$0xff]
      %v226 = vld [vmem:[%s1 + $0xb0] sm:$0xff]
      %v227 = vld [vmem:[%s1 + $0xb8] sm:$0xff]
      %v228 = vld [vmem:[%s1 + $0xc0] sm:$0xff]
      %v229 = vld [vmem:[%s1 + $0xc8] sm:$0xff]
      %v230 = vld [vmem:[%s1 + $0xd0] sm:$0xff]
      %v231 = vld [vmem:[%s1 + $0xd8] sm:$0xff]
      %v232 = vld [vmem:[%s1 + $0xe0] sm:$0xff]
      %v233 = vld [vmem:[%s1 + $0xe8] sm:$0xff]
      %v234 = vld [vmem:[%s1 + $0xf0] sm:$0xff]
      %v235 = vld [vmem:[%s1 + $0xf8] sm:$0xff]
      %v236 = vld [vmem:[%s1 + $0x100] sm:$0xff]
      %v237 = vld [vmem:[%s1 + $0x108] sm:$0xff]
      %v238 = vld [vmem:[%s1 + $0x110] sm:$0xff]
      %v239 = vld [vmem:[%s1 + $0x118] sm:$0xff]
      %v240 = vld [vmem:[%s1 + $0x120] sm:$0xff]
      %v241 = vld [vmem:[%s1 + $0x128] sm:$0xff]
      %v242 = vld [vmem:[%s1 + $0x130] sm:$0xff]
      %v243 = vld [vmem:[%s1 + $0x138] sm:$0xff]
      %v244 = vld [vmem:[%s1 + $0x140] sm:$0xff]
      %v245 = vld [vmem:[%s1 + $0x148] sm:$0xff]
      %v246 = vld [vmem:[%s1 + $0x150] sm:$0xff]
      %v247 = vld [vmem:[%s1 + $0x158] sm:$0xff]
      %v248 = vld [vmem:[%s1 + $0x160] sm:$0xff]
      %v249 = vld [vmem:[%s1 + $0x168] sm:$0xff]
      %v250 = vld [vmem:[%s1 + $0x170] sm:$0xff]
      %v251 = vld [vmem:[%s1 + $0x178] sm:$0xff]
      %v252 = vld [vmem:[%s1 + $0x180] sm:$0xff]
      %v253 = vld [vmem:[%s1 + $0x188] sm:$0xff]
      %v254 = vld [vmem:[%s1 + $0x190] sm:$0xff]
      %v255 = vld [vmem:[%s1 + $0x198] sm:$0xff]
      %v256 = vld [vmem:[%s1 + $0x1a0] sm:$0xff]
      %v257 = vld [vmem:[%s1 + $0x1a8] sm:$0xff]
      %v258 = vld [vmem:[%s1 + $0x1b0] sm:$0xff]
      %v259 = vld [vmem:[%s1 + $0x1b8] sm:$0xff]
      %v260 = vld [vmem:[%s1 + $0x1c0] sm:$0xff]
      %v261 = vld [vmem:[%s1 + $0x1c8] sm:$0xff]
      %v262 = vld [vmem:[%s1 + $0x1d0] sm:$0xff]
      %v263 = vld [vmem:[%s1 + $0x1d8] sm:$0xff]
      %v264 = vld [vmem:[%s1 + $0x1e0] sm:$0xff]
      %v265 = vld [vmem:[%s1 + $0x1e8] sm:$0xff]
      %v266 = vld [vmem:[%s1 + $0x1f0] sm:$0xff]
      %v267 = vld [vmem:[%s1 + $0x1f8] sm:$0xff]
      %v268 = vld [vmem:[%s1 + $0x200] sm:$0xff]
      %v269 = vld [vmem:[%s1 + $0x208] sm:$0xff]
      %v270 = vld [vmem:[%s1 + $0x210] sm:$0xff]
      %v271 = vld [vmem:[%s1 + $0x218] sm:$0xff]
      %v272 = vld [vmem:[%s1 + $0x220] sm:$0xff]
      %v273 = vld [vmem:[%s1 + $0x228] sm:$0xff]
      %v274 = vld [vmem:[%s1 + $0x230] sm:$0xff]
      %v275 = vld [vmem:[%s1 + $0x238] sm:$0xff]
      %v276 = vld [vmem:[%s1 + $0x240] sm:$0xff]
      %v277 = vld [vmem:[%s1 + $0x248] sm:$0xff]
      %v278 = vld [vmem:[%s1 + $0x250] sm:$0xff]
      %v279 = vld [vmem:[%s1 + $0x258] sm:$0xff]
      %v280 = vld [vmem:[%s1 + $0x260] sm:$0xff]
      %v281 = vld [vmem:[%s1 + $0x268] sm:$0xff]
      %v282 = vld [vmem:[%s1 + $0x270] sm:$0xff]
      %v283 = vld [vmem:[%s1 + $0x278] sm:$0xff]
      %v284 = vld [vmem:[%s1 + $0x280] sm:$0xff]
      %v285 = vld [vmem:[%s1 + $0x288] sm:$0xff]
      %v286 = vld [vmem:[%s1 + $0x290] sm:$0xff]
      %v287 = vld [vmem:[%s1 + $0x298] sm:$0xff]
      %v288 = vld [vmem:[%s1 + $0x2a0] sm:$0xff]
      %v289 = vld [vmem:[%s1 + $0x2a8] sm:$0xff]
      %v290 = vld [vmem:[%s1 + $0x2b0] sm:$0xff]
      %v291 = vld [vmem:[%s1 + $0x2b8] sm:$0xff]
      %v292 = vld [vmem:[%s1 + $0x2c0] sm:$0xff]
      %v293 = vld [vmem:[%s1 + $0x2c8] sm:$0xff]
      %v294 = vld [vmem:[%s1 + $0x2d0] sm:$0xff]
      %v295 = vld [vmem:[%s1 + $0x2d8] sm:$0xff]
      %v296 = vld [vmem:[%s1 + $0x2e0] sm:$0xff]
      %v297 = vld [vmem:[%s1 + $0x2e8] sm:$0xff]
      %v298 = vld [vmem:[%s1 + $0x2f0] sm:$0xff]
      %v299 = vld [vmem:[%s1 + $0x2f8] sm:$0xff]
      %v300 = vld [vmem:[%s1 + $0x300] sm:$0xff]
      %v301 = vld [vmem:[%s1 + $0x308] sm:$0xff]
      %v302 = vld [vmem:[%s1 + $0x310] sm:$0xff]
      %v303 = vld [vmem:[%s1 + $0x318] sm:$0xff]
      %v304 = vld [vmem:[%s1 + $0x320] sm:$0xff]
      %v305 = vld [vmem:[%s1 + $0x328] sm:$0xff]
      %v306 = vld [vmem:[%s1 + $0x330] sm:$0xff]
      %v307 = vld [vmem:[%s1 + $0x338] sm:$0xff]
      %v308 = vld [vmem:[%s1 + $0x340] sm:$0xff]
      %v309 = vld [vmem:[%s1 + $0x348] sm:$0xff]
      %v310 = vld [vmem:[%s1 + $0x350] sm:$0xff]
      %v311 = vld [vmem:[%s1 + $0x358] sm:$0xff]
      %v312 = vld [vmem:[%s1 + $0x360] sm:$0xff]
      %v313 = vld [vmem:[%s1 + $0x368] sm:$0xff]
      %v314 = vld [vmem:[%s1 + $0x370] sm:$0xff]
      %v315 = vld [vmem:[%s1 + $0x378] sm:$0xff]
      %v316 = vld [vmem:[%s1 + $0x380] sm:$0xff]
      %v317 = vld [vmem:[%s1 + $0x388] sm:$0xff]
      %v318 = vld [vmem:[%s1 + $0x390] sm:$0xff]
      %v319 = vld [vmem:[%s1 + $0x398] sm:$0xff]
      %v320 = vld [vmem:[%s1 + $0x3a0] sm:$0xff]
      %v321 = vld [vmem:[%s1 + $0x3a8] sm:$0xff]
      %v322 = vld [vmem:[%s1 + $0x3b0] sm:$0xff]
      %v323 = vld [vmem:[%s1 + $0x3b8] sm:$0xff]
      %v324 = vld [vmem:[%s1 + $0x3c0] sm:$0xff]
      %v325 = vld [vmem:[%s1 + $0x3c8] sm:$0xff]
      %v326 = vld [vmem:[%s1 + $0x3d0] sm:$0xff]
      %v327 = vld [vmem:[%s1 + $0x3d8] sm:$0xff]
      %v328 = vld [vmem:[%s1 + $0x3e0] sm:$0xff]
      %v329 = vld [vmem:[%s1 + $0x3e8] sm:$0xff]
      %v330 = vld [vmem:[%s1 + $0x3f0] sm:$0xff]
      %v331 = vld [vmem:[%s1 + $0x3f8] sm:$0xff]
      %v332 = vld [vmem:[%s2] sm:$0x1]
      %v334 = vperm.slane %v332, 0
      %336 = vmatpush.msra.mxu0 %v219
      %337 = vmatpush.msra.mxu0 %v218
      %338 = vmatpush.msra.mxu0 %v217
      %339 = vmatpush.msra.mxu0 %v216
      %340 = vmatpush.msra.mxu0 %v215
      %341 = vmatpush.msra.mxu0 %v214
      %342 = vmatpush.msra.mxu0 %v213
      %343 = vmatpush.msra.mxu0 %v212
      %344 = vmatpush.msra.mxu0 %v211
      %345 = vmatpush.msra.mxu0 %v210
      %346 = vmatpush.msra.mxu0 %v209
      %347 = vmatpush.msra.mxu0 %v208
      %348 = vmatpush.msra.mxu0 %v207
      %349 = vmatpush.msra.mxu0 %v206
      %350 = vmatpush.msra.mxu0 %v205
      %351 = vmatpush.msra.mxu0 %v204
      %352 = vmatmul.f32.gmra.mxu0 %v196
      %v353 = vpop.f32.mrf.mxu0
      %v354 = vadd.f32 %v334, %v353
      %355 = vdwg.mxu0
      %356 = vmatpush.msra.mxu0 %v235
      %357 = vmatpush.msra.mxu0 %v234
      %358 = vmatpush.msra.mxu0 %v233
      %359 = vmatpush.msra.mxu0 %v232
      %360 = vmatpush.msra.mxu0 %v231
      %361 = vmatpush.msra.mxu0 %v230
      %362 = vmatpush.msra.mxu0 %v229
      %363 = vmatpush.msra.mxu0 %v228
      %364 = vmatpush.msra.mxu0 %v227
      %365 = vmatpush.msra.mxu0 %v226
      %366 = vmatpush.msra.mxu0 %v225
      %367 = vmatpush.msra.mxu0 %v224
      %368 = vmatpush.msra.mxu0 %v223
      %369 = vmatpush.msra.mxu0 %v222
      %370 = vmatpush.msra.mxu0 %v221
      %371 = vmatpush.msra.mxu0 %v220
      %372 = vmatmul.f32.gmra.mxu0 %v197
      %v373 = vpop.f32.mrf.mxu0
      %v374 = vadd.f32 %v354, %v373
      %375 = vdwg.mxu0
      %376 = vmatpush.msra.mxu0 %v251
      %377 = vmatpush.msra.mxu0 %v250
      %378 = vmatpush.msra.mxu0 %v249
      %379 = vmatpush.msra.mxu0 %v248
      %380 = vmatpush.msra.mxu0 %v247
      %381 = vmatpush.msra.mxu0 %v246
      %382 = vmatpush.msra.mxu0 %v245
      %383 = vmatpush.msra.mxu0 %v244
      %384 = vmatpush.msra.mxu0 %v243
      %385 = vmatpush.msra.mxu0 %v242
      %386 = vmatpush.msra.mxu0 %v241
      %387 = vmatpush.msra.mxu0 %v240
      %388 = vmatpush.msra.mxu0 %v239
      %389 = vmatpush.msra.mxu0 %v238
      %390 = vmatpush.msra.mxu0 %v237
      %391 = vmatpush.msra.mxu0 %v236
      %392 = vmatmul.f32.gmra.mxu0 %v198
      %v393 = vpop.f32.mrf.mxu0
      %v394 = vadd.f32 %v374, %v393
      %395 = vdwg.mxu0
      %396 = vmatpush.msra.mxu0 %v267
      %397 = vmatpush.msra.mxu0 %v266
      %398 = vmatpush.msra.mxu0 %v265
      %399 = vmatpush.msra.mxu0 %v264
      %400 = vmatpush.msra.mxu0 %v263
      %401 = vmatpush.msra.mxu0 %v262
      %402 = vmatpush.msra.mxu0 %v261
      %403 = vmatpush.msra.mxu0 %v260
      %404 = vmatpush.msra.mxu0 %v259
      %405 = vmatpush.msra.mxu0 %v258
      %406 = vmatpush.msra.mxu0 %v257
      %407 = vmatpush.msra.mxu0 %v256
      %408 = vmatpush.msra.mxu0 %v255
      %409 = vmatpush.msra.mxu0 %v254
      %410 = vmatpush.msra.mxu0 %v253
      %411 = vmatpush.msra.mxu0 %v252
      %412 = vmatmul.f32.gmra.mxu0 %v199
      %v413 = vpop.f32.mrf.mxu0
      %v414 = vadd.f32 %v394, %v413
      %415 = vdwg.mxu0
      %416 = vmatpush.msra.mxu0 %v283
      %417 = vmatpush.msra.mxu0 %v282
      %418 = vmatpush.msra.mxu0 %v281
      %419 = vmatpush.msra.mxu0 %v280
      %420 = vmatpush.msra.mxu0 %v279
      %421 = vmatpush.msra.mxu0 %v278
      %422 = vmatpush.msra.mxu0 %v277
      %423 = vmatpush.msra.mxu0 %v276
      %424 = vmatpush.msra.mxu0 %v275
      %425 = vmatpush.msra.mxu0 %v274
      %426 = vmatpush.msra.mxu0 %v273
      %427 = vmatpush.msra.mxu0 %v272
      %428 = vmatpush.msra.mxu0 %v271
      %429 = vmatpush.msra.mxu0 %v270
      %430 = vmatpush.msra.mxu0 %v269
      %431 = vmatpush.msra.mxu0 %v268
      %432 = vmatmul.f32.gmra.mxu0 %v200
      %v433 = vpop.f32.mrf.mxu0
      %v434 = vadd.f32 %v414, %v433
      %435 = vdwg.mxu0
      %436 = vmatpush.msra.mxu0 %v299
      %437 = vmatpush.msra.mxu0 %v298
      %438 = vmatpush.msra.mxu0 %v297
      %439 = vmatpush.msra.mxu0 %v296
      %440 = vmatpush.msra.mxu0 %v295
      %441 = vmatpush.msra.mxu0 %v294
      %442 = vmatpush.msra.mxu0 %v293
      %443 = vmatpush.msra.mxu0 %v292
      %444 = vmatpush.msra.mxu0 %v291
      %445 = vmatpush.msra.mxu0 %v290
      %446 = vmatpush.msra.mxu0 %v289
      %447 = vmatpush.msra.mxu0 %v288
      %448 = vmatpush.msra.mxu0 %v287
      %449 = vmatpush.msra.mxu0 %v286
      %450 = vmatpush.msra.mxu0 %v285
      %451 = vmatpush.msra.mxu0 %v284
      %452 = vmatmul.f32.gmra.mxu0 %v201
      %v453 = vpop.f32.mrf.mxu0
      %v454 = vadd.f32 %v434, %v453
      %455 = vdwg.mxu0
      %456 = vmatpush.msra.mxu0 %v315
      %457 = vmatpush.msra.mxu0 %v314
      %458 = vmatpush.msra.mxu0 %v313
      %459 = vmatpush.msra.mxu0 %v312
      %460 = vmatpush.msra.mxu0 %v311
      %461 = vmatpush.msra.mxu0 %v310
      %462 = vmatpush.msra.mxu0 %v309
      %463 = vmatpush.msra.mxu0 %v308
      %464 = vmatpush.msra.mxu0 %v307
      %465 = vmatpush.msra.mxu0 %v306
      %466 = vmatpush.msra.mxu0 %v305
      %467 = vmatpush.msra.mxu0 %v304
      %468 = vmatpush.msra.mxu0 %v303
      %469 = vmatpush.msra.mxu0 %v302
      %470 = vmatpush.msra.mxu0 %v301
      %471 = vmatpush.msra.mxu0 %v300
      %472 = vmatmul.f32.gmra.mxu0 %v202
      %v473 = vpop.f32.mrf.mxu0
      %v474 = vadd.f32 %v454, %v473
      %475 = vdwg.mxu0
      %476 = vmatpush.msra.mxu0 %v331
      %477 = vmatpush.msra.mxu0 %v330
      %478 = vmatpush.msra.mxu0 %v329
      %479 = vmatpush.msra.mxu0 %v328
      %480 = vmatpush.msra.mxu0 %v327
      %481 = vmatpush.msra.mxu0 %v326
      %482 = vmatpush.msra.mxu0 %v325
      %483 = vmatpush.msra.mxu0 %v324
      %484 = vmatpush.msra.mxu0 %v323
      %485 = vmatpush.msra.mxu0 %v322
      %486 = vmatpush.msra.mxu0 %v321
      %487 = vmatpush.msra.mxu0 %v320
      %488 = vmatpush.msra.mxu0 %v319
      %489 = vmatpush.msra.mxu0 %v318
      %490 = vmatpush.msra.mxu0 %v317
      %491 = vmatpush.msra.mxu0 %v316
      %492 = vmatmul.f32.gmra.mxu0 %v203
      %v493 = vpop.f32.mrf.mxu0
      %v494 = vadd.f32 %v474, %v493
      %495 = vdwg.mxu0
      %v496 = vld [vmem:[%s3] sm:$0x1]
      %vm497 = vcmask 16384
      %v498 = vsel %vm497, %v496, -inf
      %499 = vmax.xlane.f32.xlu0 %v498
      %v500 = vpop.xlane.xlu0 %499
      %v501 = vsub.f32 %v496, %v500
      %v502 = vmul.f32 %v501, 1.442695
      %v503 = vpow.pop %v502
      %v504 = vsel %vm497, %v503, 0.0
      %505 = vadd.xlane.f32.xlu0 %v504
      %v506 = vpop.xlane.xlu0 %505
      %v507 = vrcp.pop %v506
      %v508 = vmul.f32 %v506, %v507
      %v509 = vsub.f32 1.0, %v508
      %v510 = vmul.f32 %v507, %v509
      %v511 = vadd.f32 %v507, %v510
      %vm512 = vweird.f32 %v506
      %vm513 = vweird.f32 %v507
      %vm514 = vmor %vm512, %vm513
      %v515 = vsel %vm514, %v507, %v511
      %v516 = vand.u32 2147483647, %v506
      %vm517 = vcmp.eq.f32.partialorder %v516, 8.507059e+37
      %v518 = vand.u32 %v506, 2147483648
      %v519 = vor.u32 1.1754944e-38, %v518
      %v520 = vsel %vm517, %v519, %v515
      %v521 = vmul.f32 %v503, %v520
      %vm522 = vcmask 39936
      %v523 = vsel %vm522, %v494, -inf
      %524 = vmax.xlane.f32.xlu0 %v523
      %v525 = vpop.xlane.xlu0 %524
      %v526 = vsub.f32 %v494, %v525
      %v527 = vmul.f32 %v526, 1.442695
      %v528 = vpow.pop %v527
      %v529 = vsel %vm522, %v528, 0.0
      %530 = vadd.xlane.f32.xlu0 %v529
      %v531 = vpop.xlane.xlu0 %530
      %v532 = vrcp.pop %v531
      %v533 = vmul.f32 %v531, %v532
      %v534 = vsub.f32 1.0, %v533
      %v535 = vmul.f32 %v532, %v534
      %v536 = vadd.f32 %v532, %v535
      %vm537 = vweird.f32 %v531
      %vm538 = vweird.f32 %v532
      %vm539 = vmor %vm537, %vm538
      %v540 = vsel %vm539, %v532, %v536
      %v541 = vand.u32 2147483647, %v531
      %vm542 = vcmp.eq.f32.partialorder %v541, 8.507059e+37
      %v543 = vand.u32 %v531, 2147483648
      %v544 = vor.u32 1.1754944e-38, %v543
      %v545 = vsel %vm542, %v544, %v540
      %v546 = vmul.f32 %v528, %v545
      %v548 = vperm.slane %v521, 0
      %549 = vset.pattern.permute.xlu0 0
      %550 = vperm.xlu0 %549, %v548
      %v551 = vpop.permute.xlu0 %550
      %v553 = vmul.f32 %v546, %v551
      %v554 = vadd.f32 %v553, 0.0
      %vm555 = vcmask 80936
      %v556 = vsel %vm555, %v494, -inf
      %557 = vmax.xlane.f32.xlu0 %v556
      %v558 = vpop.xlane.xlu0 %557
      %v559 = vsub.f32 %v494, %v558
      %v560 = vmul.f32 %v559, 1.442695
      %v561 = vpow.pop %v560
      %563 = vrot.lane.b32.xlu0 %v561, 123
      %v564 = vpop.permute.xlu0 %563
      %v566 = vsel %vm522, %v564, 0.0
      %567 = vadd.xlane.f32.xlu0 %v566
      %v568 = vpop.xlane.xlu0 %567
      %v569 = vrcp.pop %v568
      %v570 = vmul.f32 %v568, %v569
      %v571 = vsub.f32 1.0, %v570
      %v572 = vmul.f32 %v569, %v571
      %v573 = vadd.f32 %v569, %v572
      %vm574 = vweird.f32 %v568
      %vm575 = vweird.f32 %v569
      %vm576 = vmor %vm574, %vm575
      %v577 = vsel %vm576, %v569, %v573
      %v578 = vand.u32 2147483647, %v568
      %vm579 = vcmp.eq.f32.partialorder %v578, 8.507059e+37
      %v580 = vand.u32 %v568, 2147483648
      %v581 = vor.u32 1.1754944e-38, %v580
      %v582 = vsel %vm579, %v581, %v577
      %v583 = vmul.f32 %v561, %v582
      %584 = vset.pattern.permute.xlu0 1
      %585 = vperm.xlu0 %584, %v548
      %v586 = vpop.permute.xlu0 %585
      %v588 = vmul.f32 %v583, %v586
      %590 = vrot.lane.b32.xlu0 %v588, 123
      %v591 = vpop.permute.xlu0 %590
      %v593 = vadd.f32 %v554, %v591
      %vm594 = vcmask 121936
      %v595 = vsel %vm594, %v494, -inf
      %596 = vmax.xlane.f32.xlu0 %v595
      %v597 = vpop.xlane.xlu0 %596
      %v598 = vsub.f32 %v494, %v597
      %v599 = vmul.f32 %v598, 1.442695
      %v600 = vpow.pop %v599
      %602 = vrot.lane.b32.xlu0 %v600, 118
      %v603 = vpop.permute.xlu0 %602
      %v605 = vsel %vm522, %v603, 0.0
      %606 = vadd.xlane.f32.xlu0 %v605
      %v607 = vpop.xlane.xlu0 %606
      %v608 = vrcp.pop %v607
      %v609 = vmul.f32 %v607, %v608
      %v610 = vsub.f32 1.0, %v609
      %v611 = vmul.f32 %v608, %v610
      %v612 = vadd.f32 %v608, %v611
      %vm613 = vweird.f32 %v607
      %vm614 = vweird.f32 %v608
      %vm615 = vmor %vm613, %vm614
      %v616 = vsel %vm615, %v608, %v612
      %v617 = vand.u32 2147483647, %v607
      %vm618 = vcmp.eq.f32.partialorder %v617, 8.507059e+37
      %v619 = vand.u32 %v607, 2147483648
      %v620 = vor.u32 1.1754944e-38, %v619
      %v621 = vsel %vm618, %v620, %v616
      %v622 = vmul.f32 %v600, %v621
      %623 = vset.pattern.permute.xlu0 2
      %624 = vperm.xlu0 %623, %v548
      %v625 = vpop.permute.xlu0 %624
      %v627 = vmul.f32 %v622, %v625
      %629 = vrot.lane.b32.xlu0 %v627, 118
      %v630 = vpop.permute.xlu0 %629
      %v632 = vadd.f32 %v593, %v630
      %v633 = vadd.f32 %v632, 1e-08
      %v634 = vlog2.pop %v633
      %v635 = vmul.f32 %v634, 0.6931472
      %636 = vst.msk [vmem:[%s195] sm:$0xff] %vm522, %v635
      %p637 = scmp.lt.s32.totalorder %s15, 1
      %s638 = scalar_select %p637, %s15, 1
      %s639 = smul.addr %s638, 8
      %s640 = scalar_lea.vmem %s4, %s639
      // Predicated region
      $region37: #{tpu_custom_call.1} parent=35 // pred_check
        %p641 = pneg %p122
      $region38: #{tpu_custom_call.1} parent=35 // pred_check_branch
        %643 = sbr.rel (%p641) target = $region40
      $region39: #{tpu_custom_call.1} parent=35 // pred_region
        _
      $region40: #{tpu_custom_call.1} parent=35 // pred_fallthru
        _
    $region36: #{tpu_custom_call.1} parent=5 // pred_fallthru
      _
    %p644 = scmp.le.s32.totalorder 2, %s10
    // Predicated region
    $region41: #{tpu_custom_call.1} parent=5 // pred_check
      %p645 = pneg %p644
    $region42: #{tpu_custom_call.1} parent=5 // pred_check_branch
      %647 = sbr.rel (%p645) target = $region44
    $region43: #{tpu_custom_call.1} parent=5 // pred_region
      %s648 = ssub.s32 %s10, 2
      // Predicated region
      $region45: #{tpu_custom_call.1} parent=43 // pred_check
        %p649 = pneg %p128
      $region46: #{tpu_custom_call.1} parent=43 // pred_check_branch
        %651 = sbr.rel (%p649) target = $region48
      $region47: #{tpu_custom_call.1} parent=43 // pred_region
        %p652 = scmp.lt.s32.totalorder %s16, 1
        %s653 = scalar_select %p652, %s16, 1
        %s654 = smul.addr %s653, 8
        %s655 = scalar_lea.vmem %s4, %s654
      $region48: #{tpu_custom_call.1} parent=43 // pred_fallthru
        _
    $region44: #{tpu_custom_call.1} parent=5 // pred_fallthru
      _
  $region6: #{tpu_custom_call.1} parent=0 // loop_footer
    %s14 = sadd.s32 1, %s10
  $region7: #{tpu_custom_call.1} parent=0 // loop_footer_branch
    %9 = sbr.rel target = $region3
  $region8: #{tpu_custom_call.1} parent=0 // loop_exit
    _

</llo_original>
